<compile_context>
chip_gen: v7x
topology: tpu7x:2x2x1
jax: 0.10.0
libtpu: 0.0.40
codegen_flags: <defaults>
</compile_context>

<pallas_src>
import jax
import jax.numpy as jnp
from jax.experimental import pallas as pl
from jax.experimental.pallas import tpu as pltpu


def _lstm_step_kernel(ids_ref, emb_ref, h0_ref, c0_ref, w_ref, b_ref,
                      fcw_ref, fcb_ref, out_ref, hc_out_ref, x_scratch):
    """One time-step of a multi-layer LSTM + final linear projection.

    ids_ref : SMEM (B,)  int32 token ids
    emb_ref : VMEM (V, H)
    h0_ref  : VMEM (L, B, H)      c0_ref : VMEM (L, B, H)
    w_ref   : VMEM (L, 2H, 4H)    fused [W_ih^T ; W_hh^T], PyTorch gate order i,f,g,o
    b_ref   : VMEM (L, 1, 4H)     b_ih + b_hh
    fcw_ref : VMEM (H, O_pad)     fcb_ref : VMEM (1, O_pad)
    out_ref : VMEM (B, O_pad)     hc_out_ref : VMEM (L, B, 2H)  packed [h | c]
    x_scratch : VMEM (B, H)       gathered embeddings
    """
    num_layers, batch, hidden = h0_ref.shape

    # In-kernel embedding gather: one dynamic row read per batch element.
    for b in range(batch):
        x_scratch[pl.ds(b, 1), :] = emb_ref[pl.ds(ids_ref[b], 1), :]
    layer_in = x_scratch[...]                                   # (B, H)

    # Lane mask picking the tanh gate (g) out of the [i | f | g | o] layout.
    lane = jax.lax.broadcasted_iota(jnp.int32, (batch, 4 * hidden), 1)
    g_lane = (lane >= 2 * hidden) & (lane < 3 * hidden)

    for l in range(num_layers):                                 # static unroll
        h_prev = h0_ref[l]                                      # (B, H)
        c_prev = c0_ref[l]                                      # (B, H)

        # Fused gate matmul: [x | h] @ [W_ih^T ; W_hh^T] + bias.
        xh = jnp.concatenate([layer_in, h_prev], axis=-1)       # (B, 2H)
        gates = (jnp.dot(xh, w_ref[l], preferred_element_type=jnp.float32)
                 + b_ref[l])                                    # (B, 4H)

        # Full-tile transcendentals (EUP) + lane-mask select -> [i | f | g | o].
        act = jnp.where(g_lane, jnp.tanh(gates), jax.nn.sigmoid(gates))

        i_g = act[:, 0 * hidden:1 * hidden]
        f_g = act[:, 1 * hidden:2 * hidden]
        g_g = act[:, 2 * hidden:3 * hidden]
        o_g = act[:, 3 * hidden:4 * hidden]

        c_new = f_g * c_prev + i_g * g_g
        h_new = o_g * jnp.tanh(c_new)

        # Packed [h | c] store: one 2H-lane store per layer instead of two H-lane ones.
        hc_out_ref[l] = jnp.concatenate([h_new, c_new], axis=-1)
        layer_in = h_new

    # fc on the last layer's hidden state; padded O -> full 128-lane store.
    out_ref[...] = (jnp.dot(layer_in, fcw_ref[...],
                            preferred_element_type=jnp.float32)
                    + fcb_ref[...])


def lstm_forward(x_ids, hidden, cell, params, *, output_size):
    """Mirrors LSTM.forward(x, hidden, cell) of the PyTorch module (one step)."""
    B = x_ids.shape[0]
    L, _, H = hidden.shape
    o_pad = params["fc_w_t"].shape[1]

    vmem = pl.BlockSpec(memory_space=pltpu.MemorySpace.VMEM)
    smem = pl.BlockSpec(memory_space=pltpu.MemorySpace.SMEM)

    logits_pad, hc = pl.pallas_call(
        _lstm_step_kernel,
        out_shape=(
            jax.ShapeDtypeStruct((B, o_pad), jnp.float32),
            jax.ShapeDtypeStruct((L, B, 2 * H), jnp.float32),
        ),
        in_specs=[smem, vmem, vmem, vmem, vmem, vmem, vmem, vmem],
        out_specs=(vmem, vmem),
        scratch_shapes=[pltpu.VMEM((B, H), jnp.float32)],
    )(x_ids.astype(jnp.int32), params["embed"], hidden, cell,
      params["w_cat"], params["bias"], params["fc_w_t"], params["fc_b"])

    logits = logits_pad[:, :output_size]
    h_out = hc[:, :, :H]
    c_out = hc[:, :, H:]
    return logits, (h_out, c_out)


def _reference_forward(x_ids, hidden, cell, raw):
    """Pure-JAX reference replicating PyTorch semantics (per-gate matmuls)."""
    emb_x = jnp.take(raw["embed"], x_ids, axis=0)
    L, _, H = hidden.shape
    layer_in = emb_x
    hs, cs = [], []
    for l in range(L):
        gates = (layer_in @ raw["w_ih"][l].T + hidden[l] @ raw["w_hh"][l].T
                 + raw["b_ih"][l] + raw["b_hh"][l])
        i_g = jax.nn.sigmoid(gates[:, 0 * H:1 * H])
        f_g = jax.nn.sigmoid(gates[:, 1 * H:2 * H])
        g_g = jnp.tanh(gates[:, 2 * H:3 * H])
        o_g = jax.nn.sigmoid(gates[:, 3 * H:4 * H])
        c_new = f_g * cell[l] + i_g * g_g
        h_new = o_g * jnp.tanh(c_new)
        hs.append(h_new)
        cs.append(c_new)
        layer_in = h_new
    out = layer_in @ raw["fc_w"].T + raw["fc_b"]
    return out, (jnp.stack(hs), jnp.stack(cs))


def init_params(key, input_size, hidden_size, num_layers, output_size):
    """Parameters matching the PyTorch module's shapes (raw) plus kernel-ready forms."""
    H, L, O, V = hidden_size, num_layers, output_size, input_size
    keys = jax.random.split(key, 7)
    bound = 1.0 / (H ** 0.5)

    embed = jax.random.normal(keys[0], (V, H), jnp.float32)                      # nn.Embedding
    w_ih = jax.random.uniform(keys[1], (L, 4 * H, H), jnp.float32, -bound, bound)  # weight_ih_l{k}
    w_hh = jax.random.uniform(keys[2], (L, 4 * H, H), jnp.float32, -bound, bound)  # weight_hh_l{k}
    b_ih = jax.random.uniform(keys[3], (L, 4 * H), jnp.float32, -bound, bound)
    b_hh = jax.random.uniform(keys[4], (L, 4 * H), jnp.float32, -bound, bound)
    fc_w = jax.random.uniform(keys[5], (O, H), jnp.float32, -bound, bound)         # nn.Linear
    fc_b = jax.random.uniform(keys[6], (O,), jnp.float32, -bound, bound)

    # Fused per-layer gate weight: [x | h] @ w_cat[l] == x @ W_ih^T + h @ W_hh^T.
    w_cat = jnp.concatenate(
        [jnp.transpose(w_ih, (0, 2, 1)), jnp.transpose(w_hh, (0, 2, 1))], axis=1
    )                                              # (L, 2H, 4H)
    bias = (b_ih + b_hh)[:, None, :]               # (L, 1, 4H)

    # Zero-pad fc output dim to a multiple of 128 lanes so the logits store is full width.
    o_pad = ((O + 127) // 128) * 128
    fc_w_t = jnp.zeros((H, o_pad), jnp.float32).at[:, :O].set(fc_w.T)
    fc_b_p = jnp.zeros((1, o_pad), jnp.float32).at[:, :O].set(fc_b[None, :])

    params = {"embed": embed, "w_cat": w_cat, "bias": bias,
              "fc_w_t": fc_w_t, "fc_b": fc_b_p}
    raw = {"embed": embed, "w_ih": w_ih, "w_hh": w_hh,
           "b_ih": b_ih, "b_hh": b_hh, "fc_w": fc_w, "fc_b": fc_b}
    return params, raw


if __name__ == "__main__":
    # Small shapes consistent with the module (character-level LM style).
    input_size = 64     # vocab
    hidden_size = 32
    num_layers = 2
    output_size = 64
    batch = 8

    key = jax.random.PRNGKey(0)
    k_param, k_x = jax.random.split(key)

    params, raw = init_params(k_param, input_size, hidden_size, num_layers, output_size)

    x_ids = jax.random.randint(k_x, (batch,), 0, input_size, dtype=jnp.int32)
    # init_hidden(batch_size)
    hidden = jnp.zeros((num_layers, batch, hidden_size), jnp.float32)
    cell = jnp.zeros((num_layers, batch, hidden_size), jnp.float32)

    fwd = jax.jit(lstm_forward, static_argnames="output_size")
    out, (h_new, c_new) = fwd(x_ids, hidden, cell, params, output_size=output_size)
    jax.block_until_ready((out, h_new, c_new))

    # Verify against the pure-JAX reference (PyTorch-style per-gate math).
    ref_out, (ref_h, ref_c) = _reference_forward(x_ids, hidden, cell, raw)
    assert jnp.allclose(out, ref_out, atol=2e-5, rtol=1e-4)
    assert jnp.allclose(h_new, ref_h, atol=2e-5, rtol=1e-4)
    assert jnp.allclose(c_new, ref_c, atol=2e-5, rtol=1e-4)

    print("KERNEL_OK")
</pallas_src>

<mosaic_0001>
module attributes {stable_mosaic.version = 11 : i64} {
  func.func @_lstm_step_kernel(%arg0: memref<8xi32, #tpu.memory_space<smem>>, %arg1: memref<64x32xf32, #tpu.memory_space<vmem>>, %arg2: memref<2x8x32xf32, #tpu.memory_space<vmem>>, %arg3: memref<2x8x32xf32, #tpu.memory_space<vmem>>, %arg4: memref<2x64x128xf32, #tpu.memory_space<vmem>>, %arg5: memref<2x1x128xf32, #tpu.memory_space<vmem>>, %arg6: memref<32x128xf32, #tpu.memory_space<vmem>>, %arg7: memref<1x128xf32, #tpu.memory_space<vmem>>, %arg8: memref<8x128xf32, #tpu.memory_space<vmem>>, %arg9: memref<2x8x64xf32, #tpu.memory_space<vmem>>, %arg10: memref<8x32xf32, #tpu.memory_space<vmem>>) attributes {dimension_semantics = [], scalar_prefetch = 0 : i64, scratch_operands = 1 : i64, tpu.core_type = #tpu.core_type<tc>} {
    %c0 = arith.constant 0 : index
    %0 = memref.load %arg0[%c0] : memref<8xi32, #tpu.memory_space<smem>>
    %1 = arith.index_cast %0 : i32 to index
    %c0_0 = arith.constant 0 : index
    %2 = vector.load %arg1[%1, %c0_0] : memref<64x32xf32, #tpu.memory_space<vmem>>, vector<1x32xf32>
    %c0_1 = arith.constant 0 : index
    %c0_2 = arith.constant 0 : index
    %3 = vector.load %arg10[%c0_1, %c0_2] : memref<8x32xf32, #tpu.memory_space<vmem>>, vector<1x32xf32>
    tpu.vector_store %arg10[%c0_1, %c0_2], %2 {strides = array<i32>} : memref<8x32xf32, #tpu.memory_space<vmem>>, vector<1x32xf32>,
    %c1 = arith.constant 1 : index
    %4 = memref.load %arg0[%c1] : memref<8xi32, #tpu.memory_space<smem>>
    %5 = arith.index_cast %4 : i32 to index
    %c0_3 = arith.constant 0 : index
    %6 = vector.load %arg1[%5, %c0_3] : memref<64x32xf32, #tpu.memory_space<vmem>>, vector<1x32xf32>
    %c1_4 = arith.constant 1 : index
    %c0_5 = arith.constant 0 : index
    %7 = vector.load %arg10[%c1_4, %c0_5] : memref<8x32xf32, #tpu.memory_space<vmem>>, vector<1x32xf32>
    tpu.vector_store %arg10[%c1_4, %c0_5], %6 {strides = array<i32>} : memref<8x32xf32, #tpu.memory_space<vmem>>, vector<1x32xf32>,
    %c2 = arith.constant 2 : index
    %8 = memref.load %arg0[%c2] : memref<8xi32, #tpu.memory_space<smem>>
    %9 = arith.index_cast %8 : i32 to index
    %c0_6 = arith.constant 0 : index
    %10 = vector.load %arg1[%9, %c0_6] : memref<64x32xf32, #tpu.memory_space<vmem>>, vector<1x32xf32>
    %c2_7 = arith.constant 2 : index
    %c0_8 = arith.constant 0 : index
    %11 = vector.load %arg10[%c2_7, %c0_8] : memref<8x32xf32, #tpu.memory_space<vmem>>, vector<1x32xf32>
    tpu.vector_store %arg10[%c2_7, %c0_8], %10 {strides = array<i32>} : memref<8x32xf32, #tpu.memory_space<vmem>>, vector<1x32xf32>,
    %c3 = arith.constant 3 : index
    %12 = memref.load %arg0[%c3] : memref<8xi32, #tpu.memory_space<smem>>
    %13 = arith.index_cast %12 : i32 to index
    %c0_9 = arith.constant 0 : index
    %14 = vector.load %arg1[%13, %c0_9] : memref<64x32xf32, #tpu.memory_space<vmem>>, vector<1x32xf32>
    %c3_10 = arith.constant 3 : index
    %c0_11 = arith.constant 0 : index
    %15 = vector.load %arg10[%c3_10, %c0_11] : memref<8x32xf32, #tpu.memory_space<vmem>>, vector<1x32xf32>
    tpu.vector_store %arg10[%c3_10, %c0_11], %14 {strides = array<i32>} : memref<8x32xf32, #tpu.memory_space<vmem>>, vector<1x32xf32>,
    %c4 = arith.constant 4 : index
    %16 = memref.load %arg0[%c4] : memref<8xi32, #tpu.memory_space<smem>>
    %17 = arith.index_cast %16 : i32 to index
    %c0_12 = arith.constant 0 : index
    %18 = vector.load %arg1[%17, %c0_12] : memref<64x32xf32, #tpu.memory_space<vmem>>, vector<1x32xf32>
    %c4_13 = arith.constant 4 : index
    %c0_14 = arith.constant 0 : index
    %19 = vector.load %arg10[%c4_13, %c0_14] : memref<8x32xf32, #tpu.memory_space<vmem>>, vector<1x32xf32>
    tpu.vector_store %arg10[%c4_13, %c0_14], %18 {strides = array<i32>} : memref<8x32xf32, #tpu.memory_space<vmem>>, vector<1x32xf32>,
    %c5 = arith.constant 5 : index
    %20 = memref.load %arg0[%c5] : memref<8xi32, #tpu.memory_space<smem>>
    %21 = arith.index_cast %20 : i32 to index
    %c0_15 = arith.constant 0 : index
    %22 = vector.load %arg1[%21, %c0_15] : memref<64x32xf32, #tpu.memory_space<vmem>>, vector<1x32xf32>
    %c5_16 = arith.constant 5 : index
    %c0_17 = arith.constant 0 : index
    %23 = vector.load %arg10[%c5_16, %c0_17] : memref<8x32xf32, #tpu.memory_space<vmem>>, vector<1x32xf32>
    tpu.vector_store %arg10[%c5_16, %c0_17], %22 {strides = array<i32>} : memref<8x32xf32, #tpu.memory_space<vmem>>, vector<1x32xf32>,
    %c6 = arith.constant 6 : index
    %24 = memref.load %arg0[%c6] : memref<8xi32, #tpu.memory_space<smem>>
    %25 = arith.index_cast %24 : i32 to index
    %c0_18 = arith.constant 0 : index
    %26 = vector.load %arg1[%25, %c0_18] : memref<64x32xf32, #tpu.memory_space<vmem>>, vector<1x32xf32>
    %c6_19 = arith.constant 6 : index
    %c0_20 = arith.constant 0 : index
    %27 = vector.load %arg10[%c6_19, %c0_20] : memref<8x32xf32, #tpu.memory_space<vmem>>, vector<1x32xf32>
    tpu.vector_store %arg10[%c6_19, %c0_20], %26 {strides = array<i32>} : memref<8x32xf32, #tpu.memory_space<vmem>>, vector<1x32xf32>,
    %c7 = arith.constant 7 : index
    %28 = memref.load %arg0[%c7] : memref<8xi32, #tpu.memory_space<smem>>
    %29 = arith.index_cast %28 : i32 to index
    %c0_21 = arith.constant 0 : index
    %30 = vector.load %arg1[%29, %c0_21] : memref<64x32xf32, #tpu.memory_space<vmem>>, vector<1x32xf32>
    %c7_22 = arith.constant 7 : index
    %c0_23 = arith.constant 0 : index
    %31 = vector.load %arg10[%c7_22, %c0_23] : memref<8x32xf32, #tpu.memory_space<vmem>>, vector<1x32xf32>
    tpu.vector_store %arg10[%c7_22, %c0_23], %30 {strides = array<i32>} : memref<8x32xf32, #tpu.memory_space<vmem>>, vector<1x32xf32>,
    %c0_24 = arith.constant 0 : index
    %c0_25 = arith.constant 0 : index
    %32 = vector.load %arg10[%c0_24, %c0_25] : memref<8x32xf32, #tpu.memory_space<vmem>>, vector<8x32xf32>
    %33 = tpu.iota {dimensions = array<i32: 1>} : vector<8x128xi32>
    %c64_i32 = arith.constant 64 : i32
    %34 = vector.broadcast %c64_i32 : i32 to vector<8x128xi32>
    %35 = arith.cmpi sge, %33, %34 : vector<8x128xi32>
    %c96_i32 = arith.constant 96 : i32
    %36 = vector.broadcast %c96_i32 : i32 to vector<8x128xi32>
    %37 = arith.cmpi slt, %33, %36 : vector<8x128xi32>
    %38 = arith.andi %35, %37 : vector<8x128xi1>
    %c0_26 = arith.constant 0 : index
    %c0_27 = arith.constant 0 : index
    %c0_28 = arith.constant 0 : index
    %39 = vector.load %arg2[%c0_26, %c0_27, %c0_28] : memref<2x8x32xf32, #tpu.memory_space<vmem>>, vector<1x8x32xf32>
    %40 = vector.shape_cast %39 : vector<1x8x32xf32> to vector<8x32xf32>
    %c0_29 = arith.constant 0 : index
    %c0_30 = arith.constant 0 : index
    %c0_31 = arith.constant 0 : index
    %41 = vector.load %arg3[%c0_29, %c0_30, %c0_31] : memref<2x8x32xf32, #tpu.memory_space<vmem>>, vector<1x8x32xf32>
    %42 = vector.shape_cast %41 : vector<1x8x32xf32> to vector<8x32xf32>
    %43 = tpu.concatenate %32, %40 in 1 : vector<8x32xf32>, vector<8x32xf32> -> vector<8x64xf32>
    %c0_32 = arith.constant 0 : index
    %c0_33 = arith.constant 0 : index
    %c0_34 = arith.constant 0 : index
    %44 = vector.load %arg4[%c0_32, %c0_33, %c0_34] : memref<2x64x128xf32, #tpu.memory_space<vmem>>, vector<1x64x128xf32>
    %45 = vector.shape_cast %44 : vector<1x64x128xf32> to vector<64x128xf32>
    %cst = arith.constant dense<0.000000e+00> : vector<8x128xf32>
    %46 = tpu.matmul %43, %45, %cst {dimension_numbers = #tpu.dot_dimension_numbers<[1], [0], [0], [1], [0, 0, 1, 1], [], []>} : vector<8x64xf32>, vector<64x128xf32>, vector<8x128xf32> -> vector<8x128xf32>
    %c0_35 = arith.constant 0 : index
    %c0_36 = arith.constant 0 : index
    %c0_37 = arith.constant 0 : index
    %47 = vector.load %arg5[%c0_35, %c0_36, %c0_37] : memref<2x1x128xf32, #tpu.memory_space<vmem>>, vector<1x1x128xf32>
    %48 = vector.shape_cast %47 : vector<1x1x128xf32> to vector<1x128xf32>
    %49 = vector.broadcast %48 : vector<1x128xf32> to vector<8x128xf32>
    %50 = arith.addf %46, %49 : vector<8x128xf32>
    %51 = math.tanh %50 : vector<8x128xf32>
    %52 = arith.negf %50 : vector<8x128xf32>
    %53 = math.exp %52 : vector<8x128xf32>
    %cst_38 = arith.constant 1.000000e+00 : f32
    %54 = vector.broadcast %cst_38 : f32 to vector<8x128xf32>
    %55 = arith.addf %54, %53 : vector<8x128xf32>
    %56 = arith.divf %54, %55 : vector<8x128xf32>
    %57 = arith.select %38, %51, %56 : vector<8x128xi1>, vector<8x128xf32>
    %58 = vector.extract_strided_slice %57 {offsets = [0, 0], sizes = [8, 32], strides = [1, 1]} : vector<8x128xf32> to vector<8x32xf32>
    %59 = vector.extract_strided_slice %57 {offsets = [0, 32], sizes = [8, 32], strides = [1, 1]} : vector<8x128xf32> to vector<8x32xf32>
    %60 = vector.extract_strided_slice %57 {offsets = [0, 64], sizes = [8, 32], strides = [1, 1]} : vector<8x128xf32> to vector<8x32xf32>
    %61 = vector.extract_strided_slice %57 {offsets = [0, 96], sizes = [8, 32], strides = [1, 1]} : vector<8x128xf32> to vector<8x32xf32>
    %62 = arith.mulf %59, %42 : vector<8x32xf32>
    %63 = arith.mulf %58, %60 : vector<8x32xf32>
    %64 = arith.addf %62, %63 : vector<8x32xf32>
    %65 = math.tanh %64 : vector<8x32xf32>
    %66 = arith.mulf %61, %65 : vector<8x32xf32>
    %67 = tpu.concatenate %66, %64 in 1 : vector<8x32xf32>, vector<8x32xf32> -> vector<8x64xf32>
    %c0_39 = arith.constant 0 : index
    %c0_40 = arith.constant 0 : index
    %c0_41 = arith.constant 0 : index
    %68 = vector.load %arg9[%c0_39, %c0_40, %c0_41] : memref<2x8x64xf32, #tpu.memory_space<vmem>>, vector<1x8x64xf32>
    %69 = vector.shape_cast %68 : vector<1x8x64xf32> to vector<8x64xf32>
    %70 = vector.shape_cast %67 : vector<8x64xf32> to vector<1x8x64xf32>
    tpu.vector_store %arg9[%c0_39, %c0_40, %c0_41], %70 {strides = array<i32>} : memref<2x8x64xf32, #tpu.memory_space<vmem>>, vector<1x8x64xf32>,
    %c1_42 = arith.constant 1 : index
    %c0_43 = arith.constant 0 : index
    %c0_44 = arith.constant 0 : index
    %71 = vector.load %arg2[%c1_42, %c0_43, %c0_44] : memref<2x8x32xf32, #tpu.memory_space<vmem>>, vector<1x8x32xf32>
    %72 = vector.shape_cast %71 : vector<1x8x32xf32> to vector<8x32xf32>
    %c1_45 = arith.constant 1 : index
    %c0_46 = arith.constant 0 : index
    %c0_47 = arith.constant 0 : index
    %73 = vector.load %arg3[%c1_45, %c0_46, %c0_47] : memref<2x8x32xf32, #tpu.memory_space<vmem>>, vector<1x8x32xf32>
    %74 = vector.shape_cast %73 : vector<1x8x32xf32> to vector<8x32xf32>
    %75 = tpu.concatenate %66, %72 in 1 : vector<8x32xf32>, vector<8x32xf32> -> vector<8x64xf32>
    %c1_48 = arith.constant 1 : index
    %c0_49 = arith.constant 0 : index
    %c0_50 = arith.constant 0 : index
    %76 = vector.load %arg4[%c1_48, %c0_49, %c0_50] : memref<2x64x128xf32, #tpu.memory_space<vmem>>, vector<1x64x128xf32>
    %77 = vector.shape_cast %76 : vector<1x64x128xf32> to vector<64x128xf32>
    %cst_51 = arith.constant dense<0.000000e+00> : vector<8x128xf32>
    %78 = tpu.matmul %75, %77, %cst_51 {dimension_numbers = #tpu.dot_dimension_numbers<[1], [0], [0], [1], [0, 0, 1, 1], [], []>} : vector<8x64xf32>, vector<64x128xf32>, vector<8x128xf32> -> vector<8x128xf32>
    %c1_52 = arith.constant 1 : index
    %c0_53 = arith.constant 0 : index
    %c0_54 = arith.constant 0 : index
    %79 = vector.load %arg5[%c1_52, %c0_53, %c0_54] : memref<2x1x128xf32, #tpu.memory_space<vmem>>, vector<1x1x128xf32>
    %80 = vector.shape_cast %79 : vector<1x1x128xf32> to vector<1x128xf32>
    %81 = vector.broadcast %80 : vector<1x128xf32> to vector<8x128xf32>
    %82 = arith.addf %78, %81 : vector<8x128xf32>
    %83 = math.tanh %82 : vector<8x128xf32>
    %84 = arith.negf %82 : vector<8x128xf32>
    %85 = math.exp %84 : vector<8x128xf32>
    %cst_55 = arith.constant 1.000000e+00 : f32
    %86 = vector.broadcast %cst_55 : f32 to vector<8x128xf32>
    %87 = arith.addf %86, %85 : vector<8x128xf32>
    %88 = arith.divf %86, %87 : vector<8x128xf32>
    %89 = arith.select %38, %83, %88 : vector<8x128xi1>, vector<8x128xf32>
    %90 = vector.extract_strided_slice %89 {offsets = [0, 0], sizes = [8, 32], strides = [1, 1]} : vector<8x128xf32> to vector<8x32xf32>
    %91 = vector.extract_strided_slice %89 {offsets = [0, 32], sizes = [8, 32], strides = [1, 1]} : vector<8x128xf32> to vector<8x32xf32>
    %92 = vector.extract_strided_slice %89 {offsets = [0, 64], sizes = [8, 32], strides = [1, 1]} : vector<8x128xf32> to vector<8x32xf32>
    %93 = vector.extract_strided_slice %89 {offsets = [0, 96], sizes = [8, 32], strides = [1, 1]} : vector<8x128xf32> to vector<8x32xf32>
    %94 = arith.mulf %91, %74 : vector<8x32xf32>
    %95 = arith.mulf %90, %92 : vector<8x32xf32>
    %96 = arith.addf %94, %95 : vector<8x32xf32>
    %97 = math.tanh %96 : vector<8x32xf32>
    %98 = arith.mulf %93, %97 : vector<8x32xf32>
    %99 = tpu.concatenate %98, %96 in 1 : vector<8x32xf32>, vector<8x32xf32> -> vector<8x64xf32>
    %c1_56 = arith.constant 1 : index
    %c0_57 = arith.constant 0 : index
    %c0_58 = arith.constant 0 : index
    %100 = vector.load %arg9[%c1_56, %c0_57, %c0_58] : memref<2x8x64xf32, #tpu.memory_space<vmem>>, vector<1x8x64xf32>
    %101 = vector.shape_cast %100 : vector<1x8x64xf32> to vector<8x64xf32>
    %102 = vector.shape_cast %99 : vector<8x64xf32> to vector<1x8x64xf32>
    tpu.vector_store %arg9[%c1_56, %c0_57, %c0_58], %102 {strides = array<i32>} : memref<2x8x64xf32, #tpu.memory_space<vmem>>, vector<1x8x64xf32>,
    %c0_59 = arith.constant 0 : index
    %c0_60 = arith.constant 0 : index
    %103 = vector.load %arg6[%c0_59, %c0_60] : memref<32x128xf32, #tpu.memory_space<vmem>>, vector<32x128xf32>
    %cst_61 = arith.constant dense<0.000000e+00> : vector<8x128xf32>
    %104 = tpu.matmul %98, %103, %cst_61 {dimension_numbers = #tpu.dot_dimension_numbers<[1], [0], [0], [1], [0, 0, 1, 1], [], []>} : vector<8x32xf32>, vector<32x128xf32>, vector<8x128xf32> -> vector<8x128xf32>
    %c0_62 = arith.constant 0 : index
    %c0_63 = arith.constant 0 : index
    %105 = vector.load %arg7[%c0_62, %c0_63] : memref<1x128xf32, #tpu.memory_space<vmem>>, vector<1x128xf32>
    %106 = vector.broadcast %105 : vector<1x128xf32> to vector<8x128xf32>
    %107 = arith.addf %104, %106 : vector<8x128xf32>
    %c0_64 = arith.constant 0 : index
    %c0_65 = arith.constant 0 : index
    %108 = vector.load %arg8[%c0_64, %c0_65] : memref<8x128xf32, #tpu.memory_space<vmem>>, vector<8x128xf32>
    tpu.vector_store %arg8[%c0_64, %c0_65], %107 {strides = array<i32>} : memref<8x128xf32, #tpu.memory_space<vmem>>, vector<8x128xf32>,
    return
  }
}

</mosaic_0001>

<llo_original>
// kernel: lstm_forward.1
$region0: #{lstm_forward.1}
  #allocation0 [shape = 'u32[]', space=smem, size = 0x4, offset = 0x4, fixed_abs, tag = 'smem constant byte address 0x4 - core index']
  #allocation1 [shape = 'u32[144,128]{1,0:T(1,128)}', space=vmem, size = 0x12000, scoped, tag = 'internal scratch']
  #allocation2 [shape = 'f32[8,32]{1,0:T(8,128)}', space=vmem, size = 0x1000, scoped, tag = 'scratch operand']
  %s0 = inlined_call_operand.vmem [shape: s32[8], index: 0, kind: input, shape index: {}]
  %s1 = inlined_call_operand.vmem [shape: f32[64,32], index: 1, kind: input, shape index: {}]
  %s2 = inlined_call_operand.vmem [shape: f32[2,8,32], index: 2, kind: input, shape index: {}]
  %s3 = inlined_call_operand.vmem [shape: f32[2,8,32], index: 3, kind: input, shape index: {}]
  %s4 = inlined_call_operand.hbm [shape: f32[2,64,128], index: 4, kind: input, shape index: {}]
  %s5 = inlined_call_operand.vmem [shape: f32[2,1,128], index: 5, kind: input, shape index: {}]
  %s6 = inlined_call_operand.vmem [shape: f32[32,128], index: 6, kind: input, shape index: {}]
  %s7 = inlined_call_operand.vmem [shape: f32[1,128], index: 7, kind: input, shape index: {}]
  %s8 = inlined_call_operand.hbm [shape: f32[8,128], index: 8, kind: output, shape index: {0}]
  %s9 = inlined_call_operand.vmem [shape: f32[2,8,64], index: 9, kind: output, shape index: {1}]
  %10 = xla_tuple %s8, %s9
  %s11 = sld [smem:[#allocation0]]
  $region58: #{lstm_forward.1} parent=0
    _
  %s13 = ssub.s32 1, %s11
  %s14 = scalar_select 0, %s13, %s11
  $region1: #{lstm_forward.1} parent=0
    #allocation3 [shape = 'u8[512]{0}', space=smem, size = 0x200, scoped, tag = 'input window, operand 0, single buffered']
    #allocation4 [shape = 's32[1]{0}', space=sflag, size = 0x4, scoped, tag = 'scoped memory for lstm_forward.1']
    #allocation5 [shape = 's32[1]{0}', space=sflag, size = 0x4, scoped, tag = 'scoped memory for lstm_forward.1']
    #allocation6 [shape = 's32[1]{0}', space=sflag, size = 0x4, scoped, tag = 'scoped memory for lstm_forward.1']
    #allocation7 [shape = 'u8[65536]{0}', space=vmem, size = 0x10000, scoped, tag = 'input window, operand 4, single buffered']
    #allocation8 [shape = 'u8[4096]{0}', space=vmem, size = 0x1000, scoped, tag = 'output window, operand 0, single buffered']
    %15 = vsyncpa [#allocation6], 0
    %16 = vsyncpa [#allocation4], 0
    %17 = vsyncpa [#allocation5], 0
    // Predicated region
    $region2: #{lstm_forward.1} parent=1 // pred_check
      _
    $region3: #{lstm_forward.1} parent=1 // pred_check_branch
      %19 = sbr.rel (0) target = $region5
    $region4: #{lstm_forward.1} parent=1 // pred_region
      %s21 = ssub.s32 16, 16
      %22 = vsyncadd [#allocation6], %s21
      %s24 = sshll.u32 %s0, 4
      %s25 = int_to_ptr.vmem [resolvable:$true] %s24
      %27 = dma.vmem_to_smem %s25, 16, [#allocation3], [#allocation6]
    $region5: #{lstm_forward.1} parent=1 // pred_fallthru
      _
    // Predicated region
    $region6: #{lstm_forward.1} parent=1 // pred_check
      _
    $region7: #{lstm_forward.1} parent=1 // pred_check_branch
      %29 = sbr.rel (0) target = $region9
    $region8: #{lstm_forward.1} parent=1 // pred_region
      _
    $region9: #{lstm_forward.1} parent=1 // pred_fallthru
      _
    // Predicated region
    $region10: #{lstm_forward.1} parent=1 // pred_check
      _
    $region11: #{lstm_forward.1} parent=1 // pred_check_branch
      %31 = sbr.rel (0) target = $region13
    $region12: #{lstm_forward.1} parent=1 // pred_region
      _
    $region13: #{lstm_forward.1} parent=1 // pred_fallthru
      _
    // Predicated region
    $region14: #{lstm_forward.1} parent=1 // pred_check
      _
    $region15: #{lstm_forward.1} parent=1 // pred_check_branch
      %33 = sbr.rel (0) target = $region17
    $region16: #{lstm_forward.1} parent=1 // pred_region
      _
    $region17: #{lstm_forward.1} parent=1 // pred_fallthru
      _
    // Predicated region
    $region18: #{lstm_forward.1} parent=1 // pred_check
      _
    $region19: #{lstm_forward.1} parent=1 // pred_check_branch
      %35 = sbr.rel (0) target = $region21
    $region20: #{lstm_forward.1} parent=1 // pred_region
      %s37 = ssub.s32 2048, 2048
      %38 = vsyncadd [#allocation4], %s37
      %s39 = sshll.u32 [#allocation7], 4
      %s40 = int_to_ptr.vmem [resolvable:$true] %s39
      %45 = dma.hbm_to_vmem [thread:$0]  %s4, 2048, %s40, [#allocation4], 128, 128, 8
    $region21: #{lstm_forward.1} parent=1 // pred_fallthru
      _
    // Predicated region
    $region22: #{lstm_forward.1} parent=1 // pred_check
      _
    $region23: #{lstm_forward.1} parent=1 // pred_check_branch
      %47 = sbr.rel (0) target = $region25
    $region24: #{lstm_forward.1} parent=1 // pred_region
      _
    $region25: #{lstm_forward.1} parent=1 // pred_fallthru
      _
    // Predicated region
    $region26: #{lstm_forward.1} parent=1 // pred_check
      _
    $region27: #{lstm_forward.1} parent=1 // pred_check_branch
      %49 = sbr.rel (0) target = $region29
    $region28: #{lstm_forward.1} parent=1 // pred_region
      _
    $region29: #{lstm_forward.1} parent=1 // pred_fallthru
      _
    // Predicated region
    $region30: #{lstm_forward.1} parent=1 // pred_check
      _
    $region31: #{lstm_forward.1} parent=1 // pred_check_branch
      %51 = sbr.rel (0) target = $region33
    $region32: #{lstm_forward.1} parent=1 // pred_region
      _
    $region33: #{lstm_forward.1} parent=1 // pred_fallthru
      _
    // Predicated region
    $region34: #{lstm_forward.1} parent=1 // pred_check
      _
    $region35: #{lstm_forward.1} parent=1 // pred_check_branch
      %53 = sbr.rel (0) target = $region37
    $region36: #{lstm_forward.1} parent=1 // pred_region
      %54 = dma.done [#allocation6], 16
    $region37: #{lstm_forward.1} parent=1 // pred_fallthru
      _
    // Predicated region
    $region38: #{lstm_forward.1} parent=1 // pred_check
      _
    $region39: #{lstm_forward.1} parent=1 // pred_check_branch
      %56 = sbr.rel (0) target = $region41
    $region40: #{lstm_forward.1} parent=1 // pred_region
      %57 = dma.done [#allocation4], 2048
    $region41: #{lstm_forward.1} parent=1 // pred_fallthru
      _
    %58 = sfence
    %s59 = sld [smem:[#allocation3]]
    %s60 = scalar_lea.vmem %s1, %s59
    %v61 = vld [vmem:[%s60] sm:$0x1]
    %vm62 = vcmask 253952
    %63 = vst.msk [vmem:[#allocation2] sm:$0x1] %vm62, %v61
    %s64 = sld [smem:[#allocation3 + $0x1]]
    %s65 = scalar_lea.vmem %s1, %s64
    %v66 = vld [vmem:[%s65] sm:$0x1]
    %67 = vst.msk [vmem:[#allocation2 + $0x1] sm:$0x1] %vm62, %v66
    %s68 = sld [smem:[#allocation3 + $0x2]]
    %s69 = scalar_lea.vmem %s1, %s68
    %v70 = vld [vmem:[%s69] sm:$0x1]
    %71 = vst.msk [vmem:[#allocation2 + $0x2] sm:$0x1] %vm62, %v70
    %s72 = sld [smem:[#allocation3 + $0x3]]
    %s73 = scalar_lea.vmem %s1, %s72
    %v74 = vld [vmem:[%s73] sm:$0x1]
    %75 = vst.msk [vmem:[#allocation2 + $0x3] sm:$0x1] %vm62, %v74
    %s76 = sld [smem:[#allocation3 + $0x4]]
    %s77 = scalar_lea.vmem %s1, %s76
    %v78 = vld [vmem:[%s77] sm:$0x1]
    %79 = vst.msk [vmem:[#allocation2 + $0x4] sm:$0x1] %vm62, %v78
    %s80 = sld [smem:[#allocation3 + $0x5]]
    %s81 = scalar_lea.vmem %s1, %s80
    %v82 = vld [vmem:[%s81] sm:$0x1]
    %83 = vst.msk [vmem:[#allocation2 + $0x5] sm:$0x1] %vm62, %v82
    %s84 = sld [smem:[#allocation3 + $0x6]]
    %s85 = scalar_lea.vmem %s1, %s84
    %v86 = vld [vmem:[%s85] sm:$0x1]
    %87 = vst.msk [vmem:[#allocation2 + $0x6] sm:$0x1] %vm62, %v86
    %s88 = sld [smem:[#allocation3 + $0x7]]
    %s89 = scalar_lea.vmem %s1, %s88
    %v90 = vld [vmem:[%s89] sm:$0x1]
    %91 = vst.msk [vmem:[#allocation2 + $0x7] sm:$0x1] %vm62, %v90
    %v92 = vld [vmem:[#allocation2] sm:$0xff]
    %v93 = vlaneseq
    %v94 = vand.u32 %v93, 127
    %vm95 = vcmp.ge.s32.totalorder %v94, 64
    %vm96 = vcmp.lt.s32.totalorder %v94, 96
    %vm97 = vmand %vm95, %vm96
    %v98 = vld [vmem:[%s2] sm:$0xff]
    %v99 = vld [vmem:[%s3] sm:$0xff]
    %101 = vrot.lane.b32.xlu0 %v98, 32
    %v102 = vpop.permute.xlu0 %101
    %vm104 = vcmask 261120
    %v105 = vsel %vm104, %v92, %v102
    %v106 = vld [vmem:[#allocation7] sm:$0xff]
    %v107 = vld [vmem:[#allocation7 + $0x8] sm:$0xff]
    %v108 = vld [vmem:[#allocation7 + $0x10] sm:$0xff]
    %v109 = vld [vmem:[#allocation7 + $0x18] sm:$0xff]
    %v110 = vld [vmem:[#allocation7 + $0x20] sm:$0xff]
    %v111 = vld [vmem:[#allocation7 + $0x28] sm:$0xff]
    %v112 = vld [vmem:[#allocation7 + $0x30] sm:$0xff]
    %v113 = vld [vmem:[#allocation7 + $0x38] sm:$0xff]
    %v114 = vld [vmem:[%s5] sm:$0x1]
    %v116 = vlaneseq
    %v117 = vshrl.u32 %v116, 7
    %v118 = vsub.s32 0, %v117
    %v119 = vrot.slane %v114, %v118
    %vm121 = vcmask 523264
    %v123 = vsel %vm121, %v105, 0
    %125 = vmatprep.subr.mxu0 0.0
    %126 = vmatpush1.msra.mxu0 %v106
    %127 = vmatprep.subr.mxu0 0.0
    %128 = vmatpush1.msra.mxu0 %v107
    %129 = vmatprep.subr.mxu0 0.0
    %130 = vmatpush1.msra.mxu0 %v108
    %131 = vmatprep.subr.mxu0 0.0
    %132 = vmatpush1.msra.mxu0 %v109
    %133 = vmatprep.subr.mxu0 0.0
    %134 = vmatpush1.msra.mxu0 %v110
    %135 = vmatprep.subr.mxu0 0.0
    %136 = vmatpush1.msra.mxu0 %v111
    %137 = vmatprep.subr.mxu0 0.0
    %138 = vmatpush1.msra.mxu0 %v112
    %139 = vmatprep.subr.mxu0 0.0
    %140 = vmatpush1.msra.mxu0 %v113
    %141 = vmatprep.subr.mxu0 0.0
    %142 = vmatpush1.msra.mxu0 0.0
    %143 = vmatprep.subr.mxu0 0.0
    %144 = vmatpush1.msra.mxu0 0.0
    %145 = vmatprep.subr.mxu0 0.0
    %146 = vmatpush1.msra.mxu0 0.0
    %147 = vmatprep.subr.mxu0 0.0
    %148 = vmatpush1.msra.mxu0 0.0
    %149 = vmatprep.subr.mxu0 0.0
    %150 = vmatpush1.msra.mxu0 0.0
    %151 = vmatprep.subr.mxu0 0.0
    %152 = vmatpush1.msra.mxu0 0.0
    %153 = vmatprep.subr.mxu0 0.0
    %154 = vmatpush1.msra.mxu0 0.0
    %155 = vmatprep.subr.mxu0 0.0
    %156 = vmatpush1.msra.mxu0 0.0
    %157 = vmatprep.subr.mxu0 0.0
    %158 = vmatpush1.msra.mxu0 0.0
    %159 = vmatprep.subr.mxu0 0.0
    %160 = vmatpush1.msra.mxu0 0.0
    %161 = vmatprep.subr.mxu0 0.0
    %162 = vmatpush1.msra.mxu0 0.0
    %163 = vmatprep.subr.mxu0 0.0
    %164 = vmatpush1.msra.mxu0 0.0
    %165 = vmatprep.subr.mxu0 0.0
    %166 = vmatpush1.msra.mxu0 0.0
    %167 = vmatprep.subr.mxu0 0.0
    %168 = vmatpush1.msra.mxu0 0.0
    %169 = vmatprep.subr.mxu0 0.0
    %170 = vmatpush1.msra.mxu0 0.0
    %171 = vmatprep.subr.mxu0 0.0
    %172 = vmatpush1.msra.mxu0 0.0
    %173 = vmatprep.subr.mxu0 0.0
    %174 = vmatpush1.msra.mxu0 0.0
    %175 = vmatprep.subr.mxu0 0.0
    %176 = vmatpush1.msra.mxu0 0.0
    %177 = vmatprep.subr.mxu0 0.0
    %178 = vmatpush1.msra.mxu0 0.0
    %179 = vmatprep.subr.mxu0 0.0
    %180 = vmatpush1.msra.mxu0 0.0
    %181 = vmatprep.subr.mxu0 0.0
    %182 = vmatpush1.msra.mxu0 0.0
    %183 = vmatprep.subr.mxu0 0.0
    %184 = vmatpush1.msra.mxu0 0.0
    %185 = vmatprep.subr.mxu0 0.0
    %186 = vmatpush1.msra.mxu0 0.0
    %187 = vmatprep.subr.mxu0 0.0
    %188 = vmatpush1.msra.mxu0 0.0
    %189 = vmatprep.mubr.f32.mxu0 0.0
    %190 = vmatmul.mubr.f32.gmra.mrb[0].mxu0 %v123
    %v191 = vpop.f32.mrb[0].mxu0
    %v192 = vadd.f32 %v119, %v191
    %v193 = vpop.f32.mrb[0].mxu0
    %194 = vdwg.mxu0
    %v195 = vtanh.pop %v192
    %v196 = vxor.u32 %v192, 2147483648
    %v197 = vmul.f32 %v196, 1.442695
    %v198 = vpow.pop %v197
    %v199 = vadd.f32 %v198, 1.0
    %v200 = vrcp.pop %v199
    %v201 = vmul.f32 1.0, %v200
    %v202 = vsel %vm97, %v195, %v201
    %204 = vrot.lane.b32.xlu0 %v99, 32
    %v205 = vpop.permute.xlu0 %204
    %v207 = vmul.f32 %v202, %v205
    %209 = vrot.lane.b32.xlu0 %v202, 64
    %v210 = vpop.permute.xlu0 %209
    %v212 = vmul.f32 %v202, %v210
    %214 = vrot.lane.b32.xlu0 %v212, 32
    %v215 = vpop.permute.xlu0 %214
    %v217 = vadd.f32 %v207, %v215
    %v218 = vtanh.pop %v217
    %220 = vrot.lane.b32.xlu0 %v218, 64
    %v221 = vpop.permute.xlu0 %220
    %v223 = vmul.f32 %v202, %v221
    %225 = vrot.lane.b32.xlu0 %v223, 32
    %v226 = vpop.permute.xlu0 %225
    %v228 = vsel %vm104, %v226, %v217
    %229 = vst.msk [vmem:[%s9] sm:$0xff] %vm121, %v228
    %s230 = scalar_lea.vmem %s2, 8
    %v231 = vld [vmem:[%s230] sm:$0xff]
    %s232 = scalar_lea.vmem %s3, 8
    %v233 = vld [vmem:[%s232] sm:$0xff]
    %235 = vrot.lane.b32.xlu0 %v231, 32
    %v236 = vpop.permute.xlu0 %235
    %v238 = vsel %vm104, %v226, %v236
    %s239 = scalar_lea.vmem [#allocation7], 64
    %v240 = vld [vmem:[%s239] sm:$0xff]
    %v241 = vld [vmem:[%s239 + $0x8] sm:$0xff]
    %v242 = vld [vmem:[%s239 + $0x10] sm:$0xff]
    %v243 = vld [vmem:[%s239 + $0x18] sm:$0xff]
    %v244 = vld [vmem:[%s239 + $0x20] sm:$0xff]
    %v245 = vld [vmem:[%s239 + $0x28] sm:$0xff]
    %v246 = vld [vmem:[%s239 + $0x30] sm:$0xff]
    %v247 = vld [vmem:[%s239 + $0x38] sm:$0xff]
    %s248 = scalar_lea.vmem %s5, 1
    %v249 = vld [vmem:[%s248] sm:$0x1]
    %v251 = vlaneseq
    %v252 = vshrl.u32 %v251, 7
    %v253 = vsub.s32 0, %v252
    %v254 = vrot.slane %v249, %v253
    %v257 = vsel %vm121, %v238, 0
    %259 = vmatprep.subr.mxu0 0.0
    %260 = vmatpush1.msra.mxu0 %v240
    %261 = vmatprep.subr.mxu0 0.0
    %262 = vmatpush1.msra.mxu0 %v241
    %263 = vmatprep.subr.mxu0 0.0
    %264 = vmatpush1.msra.mxu0 %v242
    %265 = vmatprep.subr.mxu0 0.0
    %266 = vmatpush1.msra.mxu0 %v243
    %267 = vmatprep.subr.mxu0 0.0
    %268 = vmatpush1.msra.mxu0 %v244
    %269 = vmatprep.subr.mxu0 0.0
    %270 = vmatpush1.msra.mxu0 %v245
    %271 = vmatprep.subr.mxu0 0.0
    %272 = vmatpush1.msra.mxu0 %v246
    %273 = vmatprep.subr.mxu0 0.0
    %274 = vmatpush1.msra.mxu0 %v247
    %275 = vmatprep.subr.mxu0 0.0
    %276 = vmatpush1.msra.mxu0 0.0
    %277 = vmatprep.subr.mxu0 0.0
    %278 = vmatpush1.msra.mxu0 0.0
    %279 = vmatprep.subr.mxu0 0.0
    %280 = vmatpush1.msra.mxu0 0.0
    %281 = vmatprep.subr.mxu0 0.0
    %282 = vmatpush1.msra.mxu0 0.0
    %283 = vmatprep.subr.mxu0 0.0
    %284 = vmatpush1.msra.mxu0 0.0
    %285 = vmatprep.subr.mxu0 0.0
    %286 = vmatpush1.msra.mxu0 0.0
    %287 = vmatprep.subr.mxu0 0.0
    %288 = vmatpush1.msra.mxu0 0.0
    %289 = vmatprep.subr.mxu0 0.0
    %290 = vmatpush1.msra.mxu0 0.0
    %291 = vmatprep.subr.mxu0 0.0
    %292 = vmatpush1.msra.mxu0 0.0
    %293 = vmatprep.subr.mxu0 0.0
    %294 = vmatpush1.msra.mxu0 0.0
    %295 = vmatprep.subr.mxu0 0.0
    %296 = vmatpush1.msra.mxu0 0.0
    %297 = vmatprep.subr.mxu0 0.0
    %298 = vmatpush1.msra.mxu0 0.0
    %299 = vmatprep.subr.mxu0 0.0
    %300 = vmatpush1.msra.mxu0 0.0
    %301 = vmatprep.subr.mxu0 0.0
    %302 = vmatpush1.msra.mxu0 0.0
    %303 = vmatprep.subr.mxu0 0.0
    %304 = vmatpush1.msra.mxu0 0.0
    %305 = vmatprep.subr.mxu0 0.0
    %306 = vmatpush1.msra.mxu0 0.0
    %307 = vmatprep.subr.mxu0 0.0
    %308 = vmatpush1.msra.mxu0 0.0
    %309 = vmatprep.subr.mxu0 0.0
    %310 = vmatpush1.msra.mxu0 0.0
    %311 = vmatprep.subr.mxu0 0.0
    %312 = vmatpush1.msra.mxu0 0.0
    %313 = vmatprep.subr.mxu0 0.0
    %314 = vmatpush1.msra.mxu0 0.0
    %315 = vmatprep.subr.mxu0 0.0
    %316 = vmatpush1.msra.mxu0 0.0
    %317 = vmatprep.subr.mxu0 0.0
    %318 = vmatpush1.msra.mxu0 0.0
    %319 = vmatprep.subr.mxu0 0.0
    %320 = vmatpush1.msra.mxu0 0.0
    %321 = vmatprep.subr.mxu0 0.0
    %322 = vmatpush1.msra.mxu0 0.0
    %323 = vmatprep.mubr.f32.mxu0 0.0
    %324 = vmatmul.mubr.f32.gmra.mrb[0].mxu0 %v257
    %v325 = vpop.f32.mrb[0].mxu0
    %v326 = vadd.f32 %v254, %v325
    %v327 = vpop.f32.mrb[0].mxu0
    %328 = vdwg.mxu0
    %v329 = vtanh.pop %v326
    %v330 = vxor.u32 %v326, 2147483648
    %v331 = vmul.f32 %v330, 1.442695
    %v332 = vpow.pop %v331
    %v333 = vadd.f32 %v332, 1.0
    %v334 = vrcp.pop %v333
    %v335 = vmul.f32 1.0, %v334
    %v336 = vsel %vm97, %v329, %v335
    %338 = vrot.lane.b32.xlu0 %v233, 32
    %v339 = vpop.permute.xlu0 %338
    %v341 = vmul.f32 %v336, %v339
    %343 = vrot.lane.b32.xlu0 %v336, 64
    %v344 = vpop.permute.xlu0 %343
    %v346 = vmul.f32 %v336, %v344
    %348 = vrot.lane.b32.xlu0 %v346, 32
    %v349 = vpop.permute.xlu0 %348
    %v351 = vadd.f32 %v341, %v349
    %v352 = vtanh.pop %v351
    %354 = vrot.lane.b32.xlu0 %v352, 64
    %v355 = vpop.permute.xlu0 %354
    %v357 = vmul.f32 %v336, %v355
    %359 = vrot.lane.b32.xlu0 %v357, 32
    %v360 = vpop.permute.xlu0 %359
    %v362 = vsel %vm104, %v360, %v351
    %s363 = scalar_lea.vmem %s9, 8
    %364 = vst.msk [vmem:[%s363] sm:$0xff] %vm121, %v362
    %v365 = vld [vmem:[%s6] sm:$0xff]
    %v366 = vld [vmem:[%s6 + $0x8] sm:$0xff]
    %v367 = vld [vmem:[%s6 + $0x10] sm:$0xff]
    %v368 = vld [vmem:[%s6 + $0x18] sm:$0xff]
    %v369 = vld [vmem:[%s7] sm:$0x1]
    %v371 = vlaneseq
    %v372 = vshrl.u32 %v371, 7
    %v373 = vsub.s32 0, %v372
    %v374 = vrot.slane %v369, %v373
    %v376 = vsel %vm104, %v360, 0
    %378 = vmatprep.subr.mxu0 0.0
    %379 = vmatpush1.msra.mxu0 %v365
    %380 = vmatprep.subr.mxu0 0.0
    %381 = vmatpush1.msra.mxu0 %v366
    %382 = vmatprep.subr.mxu0 0.0
    %383 = vmatpush1.msra.mxu0 %v367
    %384 = vmatprep.subr.mxu0 0.0
    %385 = vmatpush1.msra.mxu0 %v368
    %386 = vmatprep.subr.mxu0 0.0
    %387 = vmatpush1.msra.mxu0 0.0
    %388 = vmatprep.subr.mxu0 0.0
    %389 = vmatpush1.msra.mxu0 0.0
    %390 = vmatprep.subr.mxu0 0.0
    %391 = vmatpush1.msra.mxu0 0.0
    %392 = vmatprep.subr.mxu0 0.0
    %393 = vmatpush1.msra.mxu0 0.0
    %394 = vmatprep.subr.mxu0 0.0
    %395 = vmatpush1.msra.mxu0 0.0
    %396 = vmatprep.subr.mxu0 0.0
    %397 = vmatpush1.msra.mxu0 0.0
    %398 = vmatprep.subr.mxu0 0.0
    %399 = vmatpush1.msra.mxu0 0.0
    %400 = vmatprep.subr.mxu0 0.0
    %401 = vmatpush1.msra.mxu0 0.0
    %402 = vmatprep.subr.mxu0 0.0
    %403 = vmatpush1.msra.mxu0 0.0
    %404 = vmatprep.subr.mxu0 0.0
    %405 = vmatpush1.msra.mxu0 0.0
    %406 = vmatprep.subr.mxu0 0.0
    %407 = vmatpush1.msra.mxu0 0.0
    %408 = vmatprep.subr.mxu0 0.0
    %409 = vmatpush1.msra.mxu0 0.0
    %410 = vmatprep.subr.mxu0 0.0
    %411 = vmatpush1.msra.mxu0 0.0
    %412 = vmatprep.subr.mxu0 0.0
    %413 = vmatpush1.msra.mxu0 0.0
    %414 = vmatprep.subr.mxu0 0.0
    %415 = vmatpush1.msra.mxu0 0.0
    %416 = vmatprep.subr.mxu0 0.0
    %417 = vmatpush1.msra.mxu0 0.0
    %418 = vmatprep.subr.mxu0 0.0
    %419 = vmatpush1.msra.mxu0 0.0
    %420 = vmatprep.subr.mxu0 0.0
    %421 = vmatpush1.msra.mxu0 0.0
    %422 = vmatprep.subr.mxu0 0.0
    %423 = vmatpush1.msra.mxu0 0.0
    %424 = vmatprep.subr.mxu0 0.0
    %425 = vmatpush1.msra.mxu0 0.0
    %426 = vmatprep.subr.mxu0 0.0
    %427 = vmatpush1.msra.mxu0 0.0
    %428 = vmatprep.subr.mxu0 0.0
    %429 = vmatpush1.msra.mxu0 0.0
    %430 = vmatprep.subr.mxu0 0.0
    %431 = vmatpush1.msra.mxu0 0.0
    %432 = vmatprep.subr.mxu0 0.0
    %433 = vmatpush1.msra.mxu0 0.0
    %434 = vmatprep.subr.mxu0 0.0
    %435 = vmatpush1.msra.mxu0 0.0
    %436 = vmatprep.subr.mxu0 0.0
    %437 = vmatpush1.msra.mxu0 0.0
    %438 = vmatprep.subr.mxu0 0.0
    %439 = vmatpush1.msra.mxu0 0.0
    %440 = vmatprep.subr.mxu0 0.0
    %441 = vmatpush1.msra.mxu0 0.0
    %442 = vmatprep.mubr.f32.mxu0 0.0
    %443 = vmatmul.mubr.f32.gmra.mrb[0].mxu0 %v376
    %v444 = vpop.f32.mrb[0].mxu0
    %v445 = vadd.f32 %v374, %v444
    %v446 = vpop.f32.mrb[0].mxu0
    %447 = vdwg.mxu0
    %448 = vst [vmem:[#allocation8] sm:$0xff] %v445
    // Predicated region
    $region42: #{lstm_forward.1} parent=1 // pred_check
      _
    $region43: #{lstm_forward.1} parent=1 // pred_check_branch
      %450 = sbr.rel (0) target = $region45
    $region44: #{lstm_forward.1} parent=1 // pred_region
      %s452 = ssub.s32 128, 128
      %453 = vsyncadd [#allocation5], %s452
      %s455 = sshll.u32 [#allocation8], 4
      %s456 = int_to_ptr.vmem [resolvable:$true] %s455
      %458 = dma.vmem_to_hbm [thread:$0]  %s456, 128, %s8, [#allocation5]
    $region45: #{lstm_forward.1} parent=1 // pred_fallthru
      _
    // Predicated region
    $region46: #{lstm_forward.1} parent=1 // pred_check
      _
    $region47: #{lstm_forward.1} parent=1 // pred_check_branch
      %460 = sbr.rel (0) target = $region49
    $region48: #{lstm_forward.1} parent=1 // pred_region
      _
    $region49: #{lstm_forward.1} parent=1 // pred_fallthru
      _
    // Predicated region
    $region50: #{lstm_forward.1} parent=1 // pred_check
      _
    $region51: #{lstm_forward.1} parent=1 // pred_check_branch
      %462 = sbr.rel (0) target = $region53
    $region52: #{lstm_forward.1} parent=1 // pred_region
      %463 = dma.done [#allocation5], 128
    $region53: #{lstm_forward.1} parent=1 // pred_fallthru
      _
    // Predicated region
    $region54: #{lstm_forward.1} parent=1 // pred_check
      _
    $region55: #{lstm_forward.1} parent=1 // pred_check_branch
      %465 = sbr.rel (0) target = $region57
    $region56: #{lstm_forward.1} parent=1 // pred_region
      _
    $region57: #{lstm_forward.1} parent=1 // pred_fallthru
      _
    %466 = vsyncpa [#allocation4], 1
    %467 = vsyncpa [#allocation5], 1
    %468 = vsyncpa [#allocation6], 1

</llo_original>
